<compile_context>
chip_gen: v6e
topology: v6e:2x2x1
jax: 0.10.0
libtpu: 0.0.40
codegen_flags: <defaults>
</compile_context>

<pallas_src>
import functools
import math

import jax
import jax.numpy as jnp
from jax import lax
from jax.experimental import pallas as pl
from jax.experimental.pallas import tpu as pltpu

_MIB = 1024 * 1024


# ---------------------------------------------------------------------------
# One-time parameter preparation (hoisted out of the per-step wrappers).
# ---------------------------------------------------------------------------
def prepare_zoneout_lstm_params(w_ih, w_hh, b_ih, b_hh,
                                compute_dtype=jnp.bfloat16):
    """Pre-transpose / cast the LSTMCell weights once.

    Returns (wx [D_in, 4H] bf16, wh [H, 4H] bf16, bias [1, 4H] f32).
    """
    wx = jnp.asarray(w_ih).T.astype(compute_dtype)
    wh = jnp.asarray(w_hh).T.astype(compute_dtype)
    bias = (jnp.asarray(b_ih, jnp.float32)
            + jnp.asarray(b_hh, jnp.float32)).reshape(1, -1)
    return wx, wh, bias


# ---------------------------------------------------------------------------
# Shared gate math: nonlinearities + LSTM combine + zoneout mix.
# ---------------------------------------------------------------------------
def _gates_to_state(gates, h_prev, c_prev, hidden_size, zoneout_rate):
    H = hidden_size
    p = float(zoneout_rate)

    if H % 128 == 0:
        # Lane-aligned slices are free (no relayout): sigmoid on i|f and o,
        # tanh only on the g block -> ~1.7x fewer EUP transcendental passes.
        if_g = jax.nn.sigmoid(gates[:, 0 * H:2 * H])
        i_g = if_g[:, :H]
        f_g = if_g[:, H:]
        g_g = jnp.tanh(gates[:, 2 * H:3 * H])
        o_g = jax.nn.sigmoid(gates[:, 3 * H:4 * H])
    else:
        # Ragged-H fallback: full-width activations selected by a lane mask so
        # sub-128-lane slicing of pre-activations is avoided.
        gate_idx = jax.lax.broadcasted_iota(jnp.int32, gates.shape, 1) // H
        act = jnp.where(gate_idx == 2, jnp.tanh(gates), jax.nn.sigmoid(gates))
        i_g = act[:, 0 * H:1 * H]
        f_g = act[:, 1 * H:2 * H]
        g_g = act[:, 2 * H:3 * H]
        o_g = act[:, 3 * H:4 * H]

    c_new = f_g * c_prev + i_g * g_g
    h_new = o_g * jnp.tanh(c_new)

    h_mix = p * h_prev + (1.0 - p) * h_new
    c_mix = p * c_prev + (1.0 - p) * c_new
    return h_mix, c_mix


# ---------------------------------------------------------------------------
# Single-step kernel (matches ZoneOutCell.forward): two accumulating dots,
# no wrapper-side concat / casts.
# ---------------------------------------------------------------------------
def _zoneout_lstm_step_kernel(x_ref, h_ref, c_ref, wx_ref, wh_ref, b_ref,
                              h_out_ref, c_out_ref, *, hidden_size,
                              zoneout_rate):
    h_prev = h_ref[...]
    c_prev = c_ref[...]
    gates = (
        jnp.dot(x_ref[...].astype(wx_ref.dtype), wx_ref[...],
                preferred_element_type=jnp.float32)
        + jnp.dot(h_prev.astype(wh_ref.dtype), wh_ref[...],
                  preferred_element_type=jnp.float32)
        + b_ref[...]
    )
    h_mix, c_mix = _gates_to_state(gates, h_prev, c_prev,
                                   hidden_size, zoneout_rate)
    h_out_ref[...] = h_mix
    c_out_ref[...] = c_mix


def zoneout_lstm_cell(x, prev_h, prev_c, params, zoneout_rate=0.1):
    """ZoneOutCell(LSTMCell) single-step forward. Returns (h_out, c_out)."""
    wx, wh, bias = params
    B = x.shape[0]
    H = wh.shape[0]

    kernel = functools.partial(_zoneout_lstm_step_kernel, hidden_size=H,
                               zoneout_rate=float(zoneout_rate))

    h_out, c_out = pl.pallas_call(
        kernel,
        out_shape=(
            jax.ShapeDtypeStruct((B, H), jnp.float32),
            jax.ShapeDtypeStruct((B, H), jnp.float32),
        ),
        in_specs=[pl.BlockSpec(memory_space=pltpu.VMEM)] * 6,
        out_specs=(
            pl.BlockSpec(memory_space=pltpu.VMEM),
            pl.BlockSpec(memory_space=pltpu.VMEM),
        ),
    )(x, prev_h.astype(jnp.float32), prev_c.astype(jnp.float32), wx, wh, bias)
    return h_out, c_out


# ---------------------------------------------------------------------------
# Sequence kernel: grid over T/U, U timesteps per grid step, weights resident
# in VMEM (constant index_map, single-buffered), f32 state carry in scratch.
# ---------------------------------------------------------------------------
def _zoneout_lstm_seq_kernel(x_ref, h0_ref, c0_ref, wx_ref, wh_ref, b_ref,
                             h_seq_ref, h_last_ref, c_last_ref,
                             h_scr, c_scr, *, hidden_size, zoneout_rate,
                             steps_per_block):
    t = pl.program_id(0)

    @pl.when(t == 0)
    def _():
        h_scr[...] = h0_ref[...]
        c_scr[...] = c0_ref[...]

    def body(u, carry):
        h_prev, c_prev = carry
        gates = (
            jnp.dot(x_ref[u], wx_ref[...], preferred_element_type=jnp.float32)
            + jnp.dot(h_prev.astype(wh_ref.dtype), wh_ref[...],
                      preferred_element_type=jnp.float32)
            + b_ref[...]
        )
        h_mix, c_mix = _gates_to_state(gates, h_prev, c_prev,
                                       hidden_size, zoneout_rate)
        h_seq_ref[u] = h_mix.astype(h_seq_ref.dtype)   # bf16 per-step output
        return h_mix, c_mix

    h_new, c_new = lax.fori_loop(0, steps_per_block, body,
                                 (h_scr[...], c_scr[...]), unroll=True)

    # f32 carry stays in scratch; final state emitted once in f32.
    h_scr[...] = h_new
    c_scr[...] = c_new
    h_last_ref[...] = h_new
    c_last_ref[...] = c_new


def _resident_spec(block_shape, index_map):
    """Constant-index (VMEM-resident) input: request single buffering."""
    try:
        return pl.BlockSpec(block_shape, index_map,
                            pipeline_mode=pl.Buffered(1))
    except (TypeError, AttributeError):   # older jax without pipeline_mode
        return pl.BlockSpec(block_shape, index_map)


def zoneout_lstm_sequence(x_seq, h0, c0, params, zoneout_rate=0.1,
                          max_steps_per_block=8):
    """Run the ZoneOut-LSTM cell over a whole sequence x_seq [T, B, D_in].

    Weights stay VMEM-resident across all T steps (constant index_map,
    single-buffered); the f32 state carry lives in VMEM scratch.
    Returns (h_seq [T, B, H] bf16, h_last [B, H] f32, c_last [B, H] f32).
    """
    wx, wh, bias = params
    T, B, D_in = x_seq.shape
    H = wh.shape[0]
    compute_dtype = wx.dtype
    bpe = jnp.dtype(compute_dtype).itemsize

    # U timesteps per grid step (largest divisor of T up to max_steps_per_block)
    U = max(u for u in range(1, min(max_steps_per_block, T) + 1) if T % u == 0)

    kernel = functools.partial(_zoneout_lstm_seq_kernel, hidden_size=H,
                               zoneout_rate=float(zoneout_rate),
                               steps_per_block=U)

    grid_spec = pltpu.PrefetchScalarGridSpec(
        num_scalar_prefetch=0,
        grid=(T // U,),
        in_specs=[
            pl.BlockSpec((U, B, D_in), lambda t: (t, 0, 0)),      # x (streamed)
            _resident_spec((B, H), lambda t: (0, 0)),             # h0
            _resident_spec((B, H), lambda t: (0, 0)),             # c0
            _resident_spec((D_in, 4 * H), lambda t: (0, 0)),      # W_ih^T
            _resident_spec((H, 4 * H), lambda t: (0, 0)),         # W_hh^T
            _resident_spec((1, 4 * H), lambda t: (0, 0)),         # bias
        ],
        out_specs=(
            pl.BlockSpec((U, B, H), lambda t: (t, 0, 0)),         # h_seq (bf16)
            pl.BlockSpec((B, H), lambda t: (0, 0)),               # h_last (f32)
            pl.BlockSpec((B, H), lambda t: (0, 0)),               # c_last (f32)
        ),
        scratch_shapes=[
            pltpu.VMEM((B, H), jnp.float32),   # h carry
            pltpu.VMEM((B, H), jnp.float32),   # c carry
        ],
    )

    # VMEM budget: resident weights single-buffered + streamed x / h_seq
    # double-buffered + states/scratch.  Clamp to [32 MiB, 64 MiB] so the
    # limit is raised above the v5e (16 MiB) / v7x (32 MiB) scoped defaults
    # but stays within v7x's 64 MiB physical VMEM.
    resident_bytes = (D_in * 4 * H + H * 4 * H) * bpe + 4 * H * 4
    state_bytes = 4 * B * H * 4                      # h0/c0 + 2x scratch (f32)
    stream_bytes = 2 * U * B * D_in * bpe            # x double-buffer
    out_bytes = 2 * U * B * H * 2 + 2 * 2 * B * H * 4
    need = resident_bytes + state_bytes + stream_bytes + out_bytes
    vmem_limit = int(min(max(int(1.5 * need), 32 * _MIB), 64 * _MIB))

    h_seq, h_last, c_last = pl.pallas_call(
        kernel,
        out_shape=(
            jax.ShapeDtypeStruct((T, B, H), compute_dtype),
            jax.ShapeDtypeStruct((B, H), jnp.float32),
            jax.ShapeDtypeStruct((B, H), jnp.float32),
        ),
        grid_spec=grid_spec,
        compiler_params=pltpu.CompilerParams(
            dimension_semantics=("arbitrary",),      # recurrence over T
            vmem_limit_bytes=vmem_limit,
        ),
    )(x_seq.astype(compute_dtype), h0.astype(jnp.float32),
      c0.astype(jnp.float32), wx, wh, bias)
    return h_seq, h_last, c_last


# ---------------------------------------------------------------------------
# Pure-JAX references (same bf16-in / f32-accumulate numerics as the kernels).
# ---------------------------------------------------------------------------
def _ref_combine(gates, h_prev, c_prev, H, p):
    i = jax.nn.sigmoid(gates[:, 0 * H:1 * H])
    f = jax.nn.sigmoid(gates[:, 1 * H:2 * H])
    g = jnp.tanh(gates[:, 2 * H:3 * H])
    o = jax.nn.sigmoid(gates[:, 3 * H:4 * H])
    c_new = f * c_prev + i * g
    h_new = o * jnp.tanh(c_new)
    return p * h_prev + (1 - p) * h_new, p * c_prev + (1 - p) * c_new


def _reference_step(x, h, c, params, p):
    wx, wh, bias = params
    H = wh.shape[0]
    gates = (jnp.dot(x.astype(wx.dtype), wx, preferred_element_type=jnp.float32)
             + jnp.dot(h.astype(wh.dtype), wh,
                       preferred_element_type=jnp.float32)
             + bias)
    return _ref_combine(gates, h.astype(jnp.float32), c.astype(jnp.float32),
                        H, p)


def _reference_sequence(x_seq, h0, c0, params, p):
    wx, wh, bias = params
    H = wh.shape[0]

    def step(carry, x_t):
        h, c = carry
        gates = (
            jnp.dot(x_t.astype(wx.dtype), wx,
                    preferred_element_type=jnp.float32)
            + jnp.dot(h.astype(wh.dtype), wh,
                      preferred_element_type=jnp.float32)
            + bias
        )
        h2, c2 = _ref_combine(gates, h, c, H, p)
        return (h2, c2), (h2, c2)

    _, (hs, cs) = lax.scan(
        step, (h0.astype(jnp.float32), c0.astype(jnp.float32)), x_seq)
    return hs, cs


if __name__ == "__main__":
    B, D_IN, H, T = 8, 32, 128, 16
    ZONEOUT_RATE = 0.1

    key = jax.random.PRNGKey(0)
    ks = jax.random.split(key, 8)
    x = jax.random.normal(ks[0], (B, D_IN), dtype=jnp.float32)
    prev_h = jax.random.normal(ks[1], (B, H), dtype=jnp.float32)
    prev_c = jax.random.normal(ks[2], (B, H), dtype=jnp.float32)
    x_seq = jax.random.normal(ks[7], (T, B, D_IN), dtype=jnp.float32)

    # Deterministic LSTMCell-style init: uniform(-1/sqrt(H), 1/sqrt(H)).
    bound = 1.0 / math.sqrt(H)
    w_ih = jax.random.uniform(ks[3], (4 * H, D_IN), jnp.float32, -bound, bound)
    w_hh = jax.random.uniform(ks[4], (4 * H, H), jnp.float32, -bound, bound)
    b_ih = jax.random.uniform(ks[5], (4 * H,), jnp.float32, -bound, bound)
    b_hh = jax.random.uniform(ks[6], (4 * H,), jnp.float32, -bound, bound)

    # Weight prep done ONCE (hoisted out of the per-step path).
    params = prepare_zoneout_lstm_params(w_ih, w_hh, b_ih, b_hh)

    # --- Single-step (module-parity) path, H % 128 == 0 fast gate path -----
    h_out, c_out = zoneout_lstm_cell(x, prev_h, prev_c, params,
                                     zoneout_rate=ZONEOUT_RATE)
    jax.block_until_ready((h_out, c_out))
    h_ref, c_ref = _reference_step(x, prev_h, prev_c, params, ZONEOUT_RATE)
    assert jnp.allclose(h_out, h_ref, atol=2e-3, rtol=2e-3)
    assert jnp.allclose(c_out, c_ref, atol=2e-3, rtol=2e-3)

    # --- Sequence path (weights VMEM-resident, U steps per grid iteration) -
    h_seq, h_last, c_last = zoneout_lstm_sequence(
        x_seq, prev_h, prev_c, params, zoneout_rate=ZONEOUT_RATE)
    jax.block_until_ready((h_seq, h_last, c_last))
    hs_ref, cs_ref = _reference_sequence(x_seq, prev_h, prev_c, params,
                                         ZONEOUT_RATE)
    assert jnp.allclose(h_seq.astype(jnp.float32), hs_ref, atol=2e-2, rtol=2e-2)
    assert jnp.allclose(h_last, hs_ref[-1], atol=2e-3, rtol=2e-3)
    assert jnp.allclose(c_last, cs_ref[-1], atol=2e-3, rtol=2e-3)

    # --- Ragged-H fallback path (H not a multiple of 128) -------------------
    H2 = 32
    w_ih2 = jax.random.uniform(ks[3], (4 * H2, D_IN), jnp.float32, -0.2, 0.2)
    w_hh2 = jax.random.uniform(ks[4], (4 * H2, H2), jnp.float32, -0.2, 0.2)
    b2 = jax.random.uniform(ks[5], (4 * H2,), jnp.float32, -0.2, 0.2)
    params2 = prepare_zoneout_lstm_params(w_ih2, w_hh2, b2, b2)
    h2_prev = jax.random.normal(ks[1], (B, H2), dtype=jnp.float32)
    c2_prev = jax.random.normal(ks[2], (B, H2), dtype=jnp.float32)
    h2_out, c2_out = zoneout_lstm_cell(x, h2_prev, c2_prev, params2,
                                       zoneout_rate=ZONEOUT_RATE)
    jax.block_until_ready((h2_out, c2_out))
    h2_ref, c2_ref = _reference_step(x, h2_prev, c2_prev, params2,
                                     ZONEOUT_RATE)
    assert jnp.allclose(h2_out, h2_ref, atol=2e-3, rtol=2e-3)
    assert jnp.allclose(c2_out, c2_ref, atol=2e-3, rtol=2e-3)

    print("KERNEL_OK")
</pallas_src>

<mosaic_0001>
module attributes {stable_mosaic.version = 11 : i64} {
  func.func @_zoneout_lstm_step_kernel(%arg0: memref<8x32xf32, #tpu.memory_space<vmem>>, %arg1: memref<8x128xf32, #tpu.memory_space<vmem>>, %arg2: memref<8x128xf32, #tpu.memory_space<vmem>>, %arg3: memref<32x512xbf16, #tpu.memory_space<vmem>>, %arg4: memref<128x512xbf16, #tpu.memory_space<vmem>>, %arg5: memref<1x512xf32, #tpu.memory_space<vmem>>, %arg6: memref<8x128xf32, #tpu.memory_space<vmem>>, %arg7: memref<8x128xf32, #tpu.memory_space<vmem>>) attributes {dimension_semantics = [], scalar_prefetch = 0 : i64, scratch_operands = 0 : i64, tpu.core_type = #tpu.core_type<tc>} {
    %c0 = arith.constant 0 : index
    %c0_0 = arith.constant 0 : index
    %0 = vector.load %arg1[%c0, %c0_0] : memref<8x128xf32, #tpu.memory_space<vmem>>, vector<8x128xf32>
    %c0_1 = arith.constant 0 : index
    %c0_2 = arith.constant 0 : index
    %1 = vector.load %arg2[%c0_1, %c0_2] : memref<8x128xf32, #tpu.memory_space<vmem>>, vector<8x128xf32>
    %c0_3 = arith.constant 0 : index
    %c0_4 = arith.constant 0 : index
    %2 = vector.load %arg0[%c0_3, %c0_4] : memref<8x32xf32, #tpu.memory_space<vmem>>, vector<8x32xf32>
    %3 = arith.truncf %2 : vector<8x32xf32> to vector<8x32xbf16>
    %c0_5 = arith.constant 0 : index
    %c0_6 = arith.constant 0 : index
    %4 = vector.load %arg3[%c0_5, %c0_6] : memref<32x512xbf16, #tpu.memory_space<vmem>>, vector<32x512xbf16>
    %cst = arith.constant dense<0.000000e+00> : vector<8x512xf32>
    %5 = tpu.matmul %3, %4, %cst {dimension_numbers = #tpu.dot_dimension_numbers<[1], [0], [0], [1], [0, 0, 1, 1], [], []>} : vector<8x32xbf16>, vector<32x512xbf16>, vector<8x512xf32> -> vector<8x512xf32>
    %6 = arith.truncf %0 : vector<8x128xf32> to vector<8x128xbf16>
    %c0_7 = arith.constant 0 : index
    %c0_8 = arith.constant 0 : index
    %7 = vector.load %arg4[%c0_7, %c0_8] : memref<128x512xbf16, #tpu.memory_space<vmem>>, vector<128x512xbf16>
    %cst_9 = arith.constant dense<0.000000e+00> : vector<8x512xf32>
    %8 = tpu.matmul %6, %7, %cst_9 {dimension_numbers = #tpu.dot_dimension_numbers<[1], [0], [0], [1], [0, 0, 1, 1], [], []>} : vector<8x128xbf16>, vector<128x512xbf16>, vector<8x512xf32> -> vector<8x512xf32>
    %9 = arith.addf %5, %8 : vector<8x512xf32>
    %c0_10 = arith.constant 0 : index
    %c0_11 = arith.constant 0 : index
    %10 = vector.load %arg5[%c0_10, %c0_11] : memref<1x512xf32, #tpu.memory_space<vmem>>, vector<1x512xf32>
    %11 = vector.broadcast %10 : vector<1x512xf32> to vector<8x512xf32>
    %12 = arith.addf %9, %11 : vector<8x512xf32>
    %13 = vector.extract_strided_slice %12 {offsets = [0, 0], sizes = [8, 256], strides = [1, 1]} : vector<8x512xf32> to vector<8x256xf32>
    %14 = arith.negf %13 : vector<8x256xf32>
    %15 = math.exp %14 : vector<8x256xf32>
    %cst_12 = arith.constant 1.000000e+00 : f32
    %16 = vector.broadcast %cst_12 : f32 to vector<8x256xf32>
    %17 = arith.addf %16, %15 : vector<8x256xf32>
    %18 = arith.divf %16, %17 : vector<8x256xf32>
    %19 = vector.extract_strided_slice %18 {offsets = [0, 0], sizes = [8, 128], strides = [1, 1]} : vector<8x256xf32> to vector<8x128xf32>
    %20 = vector.extract_strided_slice %18 {offsets = [0, 128], sizes = [8, 128], strides = [1, 1]} : vector<8x256xf32> to vector<8x128xf32>
    %21 = vector.extract_strided_slice %12 {offsets = [0, 256], sizes = [8, 128], strides = [1, 1]} : vector<8x512xf32> to vector<8x128xf32>
    %22 = math.tanh %21 : vector<8x128xf32>
    %23 = vector.extract_strided_slice %12 {offsets = [0, 384], sizes = [8, 128], strides = [1, 1]} : vector<8x512xf32> to vector<8x128xf32>
    %24 = arith.negf %23 : vector<8x128xf32>
    %25 = math.exp %24 : vector<8x128xf32>
    %cst_13 = arith.constant 1.000000e+00 : f32
    %26 = vector.broadcast %cst_13 : f32 to vector<8x128xf32>
    %27 = arith.addf %26, %25 : vector<8x128xf32>
    %28 = arith.divf %26, %27 : vector<8x128xf32>
    %29 = arith.mulf %20, %1 : vector<8x128xf32>
    %30 = arith.mulf %19, %22 : vector<8x128xf32>
    %31 = arith.addf %29, %30 : vector<8x128xf32>
    %32 = math.tanh %31 : vector<8x128xf32>
    %33 = arith.mulf %28, %32 : vector<8x128xf32>
    %cst_14 = arith.constant 1.000000e-01 : f32
    %34 = vector.broadcast %cst_14 : f32 to vector<8x128xf32>
    %35 = arith.mulf %34, %0 : vector<8x128xf32>
    %cst_15 = arith.constant 0.899999976 : f32
    %36 = vector.broadcast %cst_15 : f32 to vector<8x128xf32>
    %37 = arith.mulf %36, %33 : vector<8x128xf32>
    %38 = arith.addf %35, %37 : vector<8x128xf32>
    %cst_16 = arith.constant 1.000000e-01 : f32
    %39 = vector.broadcast %cst_16 : f32 to vector<8x128xf32>
    %40 = arith.mulf %39, %1 : vector<8x128xf32>
    %cst_17 = arith.constant 0.899999976 : f32
    %41 = vector.broadcast %cst_17 : f32 to vector<8x128xf32>
    %42 = arith.mulf %41, %31 : vector<8x128xf32>
    %43 = arith.addf %40, %42 : vector<8x128xf32>
    %c0_18 = arith.constant 0 : index
    %c0_19 = arith.constant 0 : index
    %44 = vector.load %arg6[%c0_18, %c0_19] : memref<8x128xf32, #tpu.memory_space<vmem>>, vector<8x128xf32>
    tpu.vector_store %arg6[%c0_18, %c0_19], %38 {strides = array<i32>} : memref<8x128xf32, #tpu.memory_space<vmem>>, vector<8x128xf32>,
    %c0_20 = arith.constant 0 : index
    %c0_21 = arith.constant 0 : index
    %45 = vector.load %arg7[%c0_20, %c0_21] : memref<8x128xf32, #tpu.memory_space<vmem>>, vector<8x128xf32>
    tpu.vector_store %arg7[%c0_20, %c0_21], %43 {strides = array<i32>} : memref<8x128xf32, #tpu.memory_space<vmem>>, vector<8x128xf32>,
    return
  }
}

</mosaic_0001>

<llo_original>
// kernel: tpu_custom_call.1
$region0: #{tpu_custom_call.1}
  #allocation0 [shape = 'u32[]', space=smem, size = 0x4, offset = 0x4, fixed_abs, tag = 'smem constant byte address 0x4 - core index']
  #allocation1 [shape = 'u32[144,128]{1,0:T(1,128)}', space=vmem, size = 0x12000, scoped, tag = 'internal scratch']
  %s0 = inlined_call_operand.hbm [shape: f32[8,32], index: 0, kind: input, shape index: {}]
  %s1 = inlined_call_operand.hbm [shape: f32[8,128], index: 1, kind: input, shape index: {}]
  %s2 = inlined_call_operand.hbm [shape: f32[8,128], index: 2, kind: input, shape index: {}]
  %s3 = inlined_call_operand.hbm [shape: bf16[32,512], index: 3, kind: input, shape index: {}]
  %s4 = inlined_call_operand.hbm [shape: bf16[128,512], index: 4, kind: input, shape index: {}]
  %s5 = inlined_call_operand.vmem [shape: f32[1,512], index: 5, kind: input, shape index: {}]
  %s6 = inlined_call_operand.hbm [shape: f32[8,128], index: 6, kind: output, shape index: {0}]
  %s7 = inlined_call_operand.hbm [shape: f32[8,128], index: 7, kind: output, shape index: {1}]
  %8 = xla_tuple %s6, %s7
  %s9 = sld [smem:[#allocation0]]
  $region62: #{tpu_custom_call.1} parent=0
    _
  %s11 = ssub.s32 1, %s9
  %s12 = scalar_select 0, %s11, %s9
  $region1: #{tpu_custom_call.1} parent=0
    #allocation2 [shape = 'u8[4096]{0}', space=vmem, size = 0x1000, scoped, tag = 'input window, operand 0, single buffered']
    #allocation3 [shape = 's32[1]{0}', space=sflag, size = 0x4, scoped, tag = 'scoped memory for tpu_custom_call.1']
    #allocation4 [shape = 's32[1]{0}', space=sflag, size = 0x4, scoped, tag = 'scoped memory for tpu_custom_call.1']
    #allocation5 [shape = 'u8[4096]{0}', space=vmem, size = 0x1000, scoped, tag = 'input window, operand 1, single buffered']
    #allocation6 [shape = 's32[1]{0}', space=sflag, size = 0x4, scoped, tag = 'scoped memory for tpu_custom_call.1']
    #allocation7 [shape = 'u8[4096]{0}', space=vmem, size = 0x1000, scoped, tag = 'input window, operand 2, single buffered']
    #allocation8 [shape = 'u8[32768]{0}', space=vmem, size = 0x8000, scoped, tag = 'input window, operand 3, single buffered']
    #allocation9 [shape = 's32[1]{0}', space=sflag, size = 0x4, scoped, tag = 'scoped memory for tpu_custom_call.1']
    #allocation10 [shape = 'u8[131072]{0}', space=vmem, size = 0x20000, scoped, tag = 'input window, operand 4, single buffered']
    #allocation11 [shape = 'u8[4096]{0}', space=vmem, size = 0x1000, scoped, tag = 'output window, operand 0, single buffered']
    #allocation12 [shape = 'u8[4096]{0}', space=vmem, size = 0x1000, scoped, tag = 'output window, operand 1, single buffered']
    #allocation13 [shape = 's32[1]{0}', space=sflag, size = 0x4, scoped, tag = 'scoped memory for tpu_custom_call.1']
    %13 = vsyncpa [#allocation3], 0
    %14 = vsyncpa [#allocation6], 0
    %15 = vsyncpa [#allocation9], 0
    %16 = vsyncpa [#allocation4], 0
    %17 = vsyncpa [#allocation13], 0
    // Predicated region
    $region2: #{tpu_custom_call.1} parent=1 // pred_check
      _
    $region3: #{tpu_custom_call.1} parent=1 // pred_check_branch
      %19 = sbr.rel (0) target = $region5
    $region4: #{tpu_custom_call.1} parent=1 // pred_region
      %s21 = ssub.s32 128, 128
      %22 = vsyncadd [#allocation3], %s21
      %s24 = sshll.u32 [#allocation2], 4
      %s25 = int_to_ptr.vmem [resolvable:$true] %s24
      %27 = dma.hbm_to_vmem [thread:$0]  %s0, 128, %s25, [#allocation3]
    $region5: #{tpu_custom_call.1} parent=1 // pred_fallthru
      _
    // Predicated region
    $region6: #{tpu_custom_call.1} parent=1 // pred_check
      _
    $region7: #{tpu_custom_call.1} parent=1 // pred_check_branch
      %29 = sbr.rel (0) target = $region9
    $region8: #{tpu_custom_call.1} parent=1 // pred_region
      %s31 = ssub.s32 128, 128
      %32 = vsyncadd [#allocation6], %s31
      %s34 = sshll.u32 [#allocation5], 4
      %s35 = int_to_ptr.vmem [resolvable:$true] %s34
      %37 = dma.hbm_to_vmem [thread:$0]  %s1, 128, %s35, [#allocation6]
    $region9: #{tpu_custom_call.1} parent=1 // pred_fallthru
      _
    // Predicated region
    $region10: #{tpu_custom_call.1} parent=1 // pred_check
      _
    $region11: #{tpu_custom_call.1} parent=1 // pred_check_branch
      %39 = sbr.rel (0) target = $region13
    $region12: #{tpu_custom_call.1} parent=1 // pred_region
      %s41 = ssub.s32 128, 128
      %42 = vsyncadd [#allocation6], %s41
      %s44 = sshll.u32 [#allocation7], 4
      %s45 = int_to_ptr.vmem [resolvable:$true] %s44
      %47 = dma.hbm_to_vmem [thread:$0]  %s2, 128, %s45, [#allocation6]
    $region13: #{tpu_custom_call.1} parent=1 // pred_fallthru
      _
    // Predicated region
    $region14: #{tpu_custom_call.1} parent=1 // pred_check
      _
    $region15: #{tpu_custom_call.1} parent=1 // pred_check_branch
      %49 = sbr.rel (0) target = $region17
    $region16: #{tpu_custom_call.1} parent=1 // pred_region
      %s51 = ssub.s32 1024, 1024
      %52 = vsyncadd [#allocation9], %s51
      %s53 = sshll.u32 [#allocation8], 4
      %s54 = int_to_ptr.vmem [resolvable:$true] %s53
      %59 = dma.hbm_to_vmem [thread:$0]  %s3, 1024, %s54, [#allocation9], 256, 256, 16
    $region17: #{tpu_custom_call.1} parent=1 // pred_fallthru
      _
    // Predicated region
    $region18: #{tpu_custom_call.1} parent=1 // pred_check
      _
    $region19: #{tpu_custom_call.1} parent=1 // pred_check_branch
      %61 = sbr.rel (0) target = $region21
    $region20: #{tpu_custom_call.1} parent=1 // pred_region
      %s63 = ssub.s32 4096, 4096
      %64 = vsyncadd [#allocation9], %s63
      %s65 = sshll.u32 [#allocation10], 4
      %s66 = int_to_ptr.vmem [resolvable:$true] %s65
      %71 = dma.hbm_to_vmem [thread:$0]  %s4, 4096, %s66, [#allocation9], 256, 256, 16
    $region21: #{tpu_custom_call.1} parent=1 // pred_fallthru
      _
    // Predicated region
    $region22: #{tpu_custom_call.1} parent=1 // pred_check
      _
    $region23: #{tpu_custom_call.1} parent=1 // pred_check_branch
      %73 = sbr.rel (0) target = $region25
    $region24: #{tpu_custom_call.1} parent=1 // pred_region
      _
    $region25: #{tpu_custom_call.1} parent=1 // pred_fallthru
      _
    // Predicated region
    $region26: #{tpu_custom_call.1} parent=1 // pred_check
      _
    $region27: #{tpu_custom_call.1} parent=1 // pred_check_branch
      %75 = sbr.rel (0) target = $region29
    $region28: #{tpu_custom_call.1} parent=1 // pred_region
      %76 = dma.done [#allocation3], 128
    $region29: #{tpu_custom_call.1} parent=1 // pred_fallthru
      _
    // Predicated region
    $region30: #{tpu_custom_call.1} parent=1 // pred_check
      _
    $region31: #{tpu_custom_call.1} parent=1 // pred_check_branch
      %78 = sbr.rel (0) target = $region33
    $region32: #{tpu_custom_call.1} parent=1 // pred_region
      %79 = dma.done [#allocation6], 128
    $region33: #{tpu_custom_call.1} parent=1 // pred_fallthru
      _
    // Predicated region
    $region34: #{tpu_custom_call.1} parent=1 // pred_check
      _
    $region35: #{tpu_custom_call.1} parent=1 // pred_check_branch
      %81 = sbr.rel (0) target = $region37
    $region36: #{tpu_custom_call.1} parent=1 // pred_region
      %82 = dma.done [#allocation6], 128
    $region37: #{tpu_custom_call.1} parent=1 // pred_fallthru
      _
    // Predicated region
    $region38: #{tpu_custom_call.1} parent=1 // pred_check
      _
    $region39: #{tpu_custom_call.1} parent=1 // pred_check_branch
      %84 = sbr.rel (0) target = $region41
    $region40: #{tpu_custom_call.1} parent=1 // pred_region
      %85 = dma.done [#allocation9], 1024
    $region41: #{tpu_custom_call.1} parent=1 // pred_fallthru
      _
    // Predicated region
    $region42: #{tpu_custom_call.1} parent=1 // pred_check
      _
    $region43: #{tpu_custom_call.1} parent=1 // pred_check_branch
      %87 = sbr.rel (0) target = $region45
    $region44: #{tpu_custom_call.1} parent=1 // pred_region
      %88 = dma.done [#allocation9], 4096
    $region45: #{tpu_custom_call.1} parent=1 // pred_fallthru
      _
    %v90 = vld [vmem:[#allocation5] sm:$0xff]
    %v91 = vld [vmem:[#allocation7] sm:$0xff]
    %v92 = vld [vmem:[#allocation2] sm:$0xff]
    %v93 = vpack.c.bf16 %v92, %v92
    %v94 = vld [vmem:[#allocation8] sm:$0xff]
    %v95 = vld [vmem:[#allocation8 + $0x8] sm:$0xff]
    %v96 = vld [vmem:[#allocation8 + $0x10] sm:$0xff]
    %v97 = vld [vmem:[#allocation8 + $0x18] sm:$0xff]
    %v98 = vld [vmem:[#allocation8 + $0x20] sm:$0xff]
    %v99 = vld [vmem:[#allocation8 + $0x28] sm:$0xff]
    %v100 = vld [vmem:[#allocation8 + $0x30] sm:$0xff]
    %v101 = vld [vmem:[#allocation8 + $0x38] sm:$0xff]
    %v102 = vpack.c.bf16 %v90, %v90
    %v103 = vld [vmem:[#allocation10] sm:$0xff]
    %v104 = vld [vmem:[#allocation10 + $0x8] sm:$0xff]
    %v105 = vld [vmem:[#allocation10 + $0x10] sm:$0xff]
    %v106 = vld [vmem:[#allocation10 + $0x18] sm:$0xff]
    %v107 = vld [vmem:[#allocation10 + $0x20] sm:$0xff]
    %v108 = vld [vmem:[#allocation10 + $0x28] sm:$0xff]
    %v109 = vld [vmem:[#allocation10 + $0x30] sm:$0xff]
    %v110 = vld [vmem:[#allocation10 + $0x38] sm:$0xff]
    %v111 = vld [vmem:[#allocation10 + $0x40] sm:$0xff]
    %v112 = vld [vmem:[#allocation10 + $0x48] sm:$0xff]
    %v113 = vld [vmem:[#allocation10 + $0x50] sm:$0xff]
    %v114 = vld [vmem:[#allocation10 + $0x58] sm:$0xff]
    %v115 = vld [vmem:[#allocation10 + $0x60] sm:$0xff]
    %v116 = vld [vmem:[#allocation10 + $0x68] sm:$0xff]
    %v117 = vld [vmem:[#allocation10 + $0x70] sm:$0xff]
    %v118 = vld [vmem:[#allocation10 + $0x78] sm:$0xff]
    %v119 = vld [vmem:[#allocation10 + $0x80] sm:$0xff]
    %v120 = vld [vmem:[#allocation10 + $0x88] sm:$0xff]
    %v121 = vld [vmem:[#allocation10 + $0x90] sm:$0xff]
    %v122 = vld [vmem:[#allocation10 + $0x98] sm:$0xff]
    %v123 = vld [vmem:[#allocation10 + $0xa0] sm:$0xff]
    %v124 = vld [vmem:[#allocation10 + $0xa8] sm:$0xff]
    %v125 = vld [vmem:[#allocation10 + $0xb0] sm:$0xff]
    %v126 = vld [vmem:[#allocation10 + $0xb8] sm:$0xff]
    %v127 = vld [vmem:[#allocation10 + $0xc0] sm:$0xff]
    %v128 = vld [vmem:[#allocation10 + $0xc8] sm:$0xff]
    %v129 = vld [vmem:[#allocation10 + $0xd0] sm:$0xff]
    %v130 = vld [vmem:[#allocation10 + $0xd8] sm:$0xff]
    %v131 = vld [vmem:[#allocation10 + $0xe0] sm:$0xff]
    %v132 = vld [vmem:[#allocation10 + $0xe8] sm:$0xff]
    %v133 = vld [vmem:[#allocation10 + $0xf0] sm:$0xff]
    %v134 = vld [vmem:[#allocation10 + $0xf8] sm:$0xff]
    %v167 = vunpack.c.l.b16 %v103
    %v168 = vunpack.c.h.b16 %v103
    %v169 = vunpack.c.l.b16 %v104
    %v170 = vunpack.c.h.b16 %v104
    %v171 = vunpack.c.l.b16 %v105
    %v172 = vunpack.c.h.b16 %v105
    %v173 = vunpack.c.l.b16 %v106
    %v174 = vunpack.c.h.b16 %v106
    %v175 = vunpack.c.l.b16 %v107
    %v176 = vunpack.c.h.b16 %v107
    %v177 = vunpack.c.l.b16 %v108
    %v178 = vunpack.c.h.b16 %v108
    %v179 = vunpack.c.l.b16 %v109
    %v180 = vunpack.c.h.b16 %v109
    %v181 = vunpack.c.l.b16 %v110
    %v182 = vunpack.c.h.b16 %v110
    %v183 = vunpack.c.l.b16 %v111
    %v184 = vunpack.c.h.b16 %v111
    %v185 = vunpack.c.l.b16 %v112
    %v186 = vunpack.c.h.b16 %v112
    %v187 = vunpack.c.l.b16 %v113
    %v188 = vunpack.c.h.b16 %v113
    %v189 = vunpack.c.l.b16 %v114
    %v190 = vunpack.c.h.b16 %v114
    %v191 = vunpack.c.l.b16 %v115
    %v192 = vunpack.c.h.b16 %v115
    %v193 = vunpack.c.l.b16 %v116
    %v194 = vunpack.c.h.b16 %v116
    %v195 = vunpack.c.l.b16 %v117
    %v196 = vunpack.c.h.b16 %v117
    %v197 = vunpack.c.l.b16 %v118
    %v198 = vunpack.c.h.b16 %v118
    %v199 = vunpack.c.l.b16 %v119
    %v200 = vunpack.c.h.b16 %v119
    %v201 = vunpack.c.l.b16 %v120
    %v202 = vunpack.c.h.b16 %v120
    %v203 = vunpack.c.l.b16 %v121
    %v204 = vunpack.c.h.b16 %v121
    %v205 = vunpack.c.l.b16 %v122
    %v206 = vunpack.c.h.b16 %v122
    %v207 = vunpack.c.l.b16 %v123
    %v208 = vunpack.c.h.b16 %v123
    %v209 = vunpack.c.l.b16 %v124
    %v210 = vunpack.c.h.b16 %v124
    %v211 = vunpack.c.l.b16 %v125
    %v212 = vunpack.c.h.b16 %v125
    %v213 = vunpack.c.l.b16 %v126
    %v214 = vunpack.c.h.b16 %v126
    %v215 = vunpack.c.l.b16 %v127
    %v216 = vunpack.c.h.b16 %v127
    %v217 = vunpack.c.l.b16 %v128
    %v218 = vunpack.c.h.b16 %v128
    %v219 = vunpack.c.l.b16 %v129
    %v220 = vunpack.c.h.b16 %v129
    %v221 = vunpack.c.l.b16 %v130
    %v222 = vunpack.c.h.b16 %v130
    %v223 = vunpack.c.l.b16 %v131
    %v224 = vunpack.c.h.b16 %v131
    %v225 = vunpack.c.l.b16 %v132
    %v226 = vunpack.c.h.b16 %v132
    %v227 = vunpack.c.l.b16 %v133
    %v228 = vunpack.c.h.b16 %v133
    %v229 = vunpack.c.l.b16 %v134
    %v230 = vunpack.c.h.b16 %v134
    %v231 = vpack.c.b16 %v171, %v167
    %v232 = vpack.c.b16 %v172, %v168
    %v233 = vpack.c.b16 %v173, %v169
    %v234 = vpack.c.b16 %v174, %v170
    %v235 = vpack.c.b16 %v179, %v175
    %v236 = vpack.c.b16 %v180, %v176
    %v237 = vpack.c.b16 %v181, %v177
    %v238 = vpack.c.b16 %v182, %v178
    %v239 = vpack.c.b16 %v187, %v183
    %v240 = vpack.c.b16 %v188, %v184
    %v241 = vpack.c.b16 %v189, %v185
    %v242 = vpack.c.b16 %v190, %v186
    %v243 = vpack.c.b16 %v195, %v191
    %v244 = vpack.c.b16 %v196, %v192
    %v245 = vpack.c.b16 %v197, %v193
    %v246 = vpack.c.b16 %v198, %v194
    %v247 = vpack.c.b16 %v203, %v199
    %v248 = vpack.c.b16 %v204, %v200
    %v249 = vpack.c.b16 %v205, %v201
    %v250 = vpack.c.b16 %v206, %v202
    %v251 = vpack.c.b16 %v211, %v207
    %v252 = vpack.c.b16 %v212, %v208
    %v253 = vpack.c.b16 %v213, %v209
    %v254 = vpack.c.b16 %v214, %v210
    %v255 = vpack.c.b16 %v219, %v215
    %v256 = vpack.c.b16 %v220, %v216
    %v257 = vpack.c.b16 %v221, %v217
    %v258 = vpack.c.b16 %v222, %v218
    %v259 = vpack.c.b16 %v227, %v223
    %v260 = vpack.c.b16 %v228, %v224
    %v261 = vpack.c.b16 %v229, %v225
    %v262 = vpack.c.b16 %v230, %v226
    %295 = vmatprep.subr.bf16.mxu0 %v260
    %296 = vmatpush1.bf16.msra.mxu0 %v259
    %297 = vmatprep.subr.bf16.mxu0 %v256
    %298 = vmatpush1.bf16.msra.mxu0 %v255
    %299 = vmatprep.subr.bf16.mxu0 %v252
    %300 = vmatpush1.bf16.msra.mxu0 %v251
    %301 = vmatprep.subr.bf16.mxu0 %v248
    %302 = vmatpush1.bf16.msra.mxu0 %v247
    %303 = vmatprep.subr.bf16.mxu0 %v244
    %304 = vmatpush1.bf16.msra.mxu0 %v243
    %305 = vmatprep.subr.bf16.mxu0 %v240
    %306 = vmatpush1.bf16.msra.mxu0 %v239
    %307 = vmatprep.subr.bf16.mxu0 %v236
    %308 = vmatpush1.bf16.msra.mxu0 %v235
    %309 = vmatprep.subr.bf16.mxu0 %v232
    %310 = vmatpush1.bf16.msra.mxu0 %v231
    %311 = vmatprep.subr.bf16.mxu0 0
    %312 = vmatpush2.bf16.msra.mxu0 0
    %313 = vmatprep.subr.bf16.mxu0 0
    %314 = vmatpush2.bf16.msra.mxu0 0
    %315 = vmatprep.subr.bf16.mxu0 0
    %316 = vmatpush2.bf16.msra.mxu0 0
    %317 = vmatprep.subr.bf16.mxu0 0
    %318 = vmatpush2.bf16.msra.mxu0 0
    %319 = vmatprep.subr.bf16.mxu0 0
    %320 = vmatpush2.bf16.msra.mxu0 0
    %321 = vmatprep.subr.bf16.mxu0 0
    %322 = vmatpush2.bf16.msra.mxu0 0
    %323 = vmatprep.subr.bf16.mxu0 0
    %324 = vmatpush2.bf16.msra.mxu0 0
    %325 = vmatprep.subr.bf16.mxu0 0
    %326 = vmatpush2.bf16.msra.mxu0 0
    %327 = vmatprep.mubr.bf16.mxu0 0
    %328 = vmatmul.mubr.bf16.gmra.mxu0 %v102
    %v329 = vpop.f32.mrf.mxu0
    %v330 = vadd.f32 0.0, %v329
    %v331 = vpop.f32.mrf.mxu0
    %v332 = vadd.f32 0.0, %v331
    %v333 = vpop.f32.mrf.mxu0
    %v334 = vpop.f32.mrf.mxu0
    %335 = vdwg.mxu0
    %336 = vmatprep.subr.bf16.mxu0 %v262
    %337 = vmatpush1.bf16.msra.mxu0 %v261
    %338 = vmatprep.subr.bf16.mxu0 %v258
    %339 = vmatpush1.bf16.msra.mxu0 %v257
    %340 = vmatprep.subr.bf16.mxu0 %v254
    %341 = vmatpush1.bf16.msra.mxu0 %v253
    %342 = vmatprep.subr.bf16.mxu0 %v250
    %343 = vmatpush1.bf16.msra.mxu0 %v249
    %344 = vmatprep.subr.bf16.mxu0 %v246
    %345 = vmatpush1.bf16.msra.mxu0 %v245
    %346 = vmatprep.subr.bf16.mxu0 %v242
    %347 = vmatpush1.bf16.msra.mxu0 %v241
    %348 = vmatprep.subr.bf16.mxu0 %v238
    %349 = vmatpush1.bf16.msra.mxu0 %v237
    %350 = vmatprep.subr.bf16.mxu0 %v234
    %351 = vmatpush1.bf16.msra.mxu0 %v233
    %352 = vmatprep.subr.bf16.mxu0 0
    %353 = vmatpush2.bf16.msra.mxu0 0
    %354 = vmatprep.subr.bf16.mxu0 0
    %355 = vmatpush2.bf16.msra.mxu0 0
    %356 = vmatprep.subr.bf16.mxu0 0
    %357 = vmatpush2.bf16.msra.mxu0 0
    %358 = vmatprep.subr.bf16.mxu0 0
    %359 = vmatpush2.bf16.msra.mxu0 0
    %360 = vmatprep.subr.bf16.mxu0 0
    %361 = vmatpush2.bf16.msra.mxu0 0
    %362 = vmatprep.subr.bf16.mxu0 0
    %363 = vmatpush2.bf16.msra.mxu0 0
    %364 = vmatprep.subr.bf16.mxu0 0
    %365 = vmatpush2.bf16.msra.mxu0 0
    %366 = vmatprep.subr.bf16.mxu0 0
    %367 = vmatpush2.bf16.msra.mxu0 0
    %368 = vmatprep.mubr.bf16.mxu0 0
    %369 = vmatmul.mubr.bf16.gmra.mxu0 %v102
    %v370 = vpop.f32.mrf.mxu0
    %v371 = vadd.f32 0.0, %v370
    %v372 = vpop.f32.mrf.mxu0
    %v373 = vadd.f32 0.0, %v372
    %v374 = vpop.f32.mrf.mxu0
    %v375 = vpop.f32.mrf.mxu0
    %376 = vdwg.mxu0
    %v385 = vunpack.c.l.b16 %v94
    %v386 = vunpack.c.h.b16 %v94
    %v387 = vunpack.c.l.b16 %v95
    %v388 = vunpack.c.h.b16 %v95
    %v389 = vunpack.c.l.b16 %v96
    %v390 = vunpack.c.h.b16 %v96
    %v391 = vunpack.c.l.b16 %v97
    %v392 = vunpack.c.h.b16 %v97
    %v393 = vunpack.c.l.b16 %v98
    %v394 = vunpack.c.h.b16 %v98
    %v395 = vunpack.c.l.b16 %v99
    %v396 = vunpack.c.h.b16 %v99
    %v397 = vunpack.c.l.b16 %v100
    %v398 = vunpack.c.h.b16 %v100
    %v399 = vunpack.c.l.b16 %v101
    %v400 = vunpack.c.h.b16 %v101
    %v401 = vpack.c.b16 %v389, %v385
    %v402 = vpack.c.b16 %v390, %v386
    %v403 = vpack.c.b16 %v391, %v387
    %v404 = vpack.c.b16 %v392, %v388
    %v405 = vpack.c.b16 %v397, %v393
    %v406 = vpack.c.b16 %v398, %v394
    %v407 = vpack.c.b16 %v399, %v395
    %v408 = vpack.c.b16 %v400, %v396
    %vm417 = vcmask 261120
    %v419 = vsel %vm417, %v93, 0
    %421 = vmatprep.subr.bf16.mxu0 0
    %422 = vmatpush1.bf16.msra.mxu0 0
    %423 = vmatprep.subr.bf16.mxu0 0
    %424 = vmatpush1.bf16.msra.mxu0 0
    %425 = vmatprep.subr.bf16.mxu0 0
    %426 = vmatpush1.bf16.msra.mxu0 0
    %427 = vmatprep.subr.bf16.mxu0 0
    %428 = vmatpush1.bf16.msra.mxu0 0
    %429 = vmatprep.subr.bf16.mxu0 0
    %430 = vmatpush1.bf16.msra.mxu0 0
    %431 = vmatprep.subr.bf16.mxu0 0
    %432 = vmatpush1.bf16.msra.mxu0 0
    %433 = vmatprep.subr.bf16.mxu0 %v406
    %434 = vmatpush1.bf16.msra.mxu0 %v405
    %435 = vmatprep.subr.bf16.mxu0 %v402
    %436 = vmatpush1.bf16.msra.mxu0 %v401
    %437 = vmatprep.subr.bf16.mxu0 0
    %438 = vmatpush2.bf16.msra.mxu0 0
    %439 = vmatprep.subr.bf16.mxu0 0
    %440 = vmatpush2.bf16.msra.mxu0 0
    %441 = vmatprep.subr.bf16.mxu0 0
    %442 = vmatpush2.bf16.msra.mxu0 0
    %443 = vmatprep.subr.bf16.mxu0 0
    %444 = vmatpush2.bf16.msra.mxu0 0
    %445 = vmatprep.subr.bf16.mxu0 0
    %446 = vmatpush2.bf16.msra.mxu0 0
    %447 = vmatprep.subr.bf16.mxu0 0
    %448 = vmatpush2.bf16.msra.mxu0 0
    %449 = vmatprep.subr.bf16.mxu0 0
    %450 = vmatpush2.bf16.msra.mxu0 0
    %451 = vmatprep.subr.bf16.mxu0 0
    %452 = vmatpush2.bf16.msra.mxu0 0
    %453 = vmatprep.mubr.bf16.mxu0 0
    %454 = vmatmul.mubr.bf16.gmra.mxu0 %v419
    %v455 = vpop.f32.mrf.mxu0
    %v456 = vadd.f32 %v330, %v455
    %v457 = vpop.f32.mrf.mxu0
    %v458 = vadd.f32 %v332, %v457
    %v459 = vpop.f32.mrf.mxu0
    %v460 = vpop.f32.mrf.mxu0
    %461 = vdwg.mxu0
    %462 = vmatprep.subr.bf16.mxu0 0
    %463 = vmatpush1.bf16.msra.mxu0 0
    %464 = vmatprep.subr.bf16.mxu0 0
    %465 = vmatpush1.bf16.msra.mxu0 0
    %466 = vmatprep.subr.bf16.mxu0 0
    %467 = vmatpush1.bf16.msra.mxu0 0
    %468 = vmatprep.subr.bf16.mxu0 0
    %469 = vmatpush1.bf16.msra.mxu0 0
    %470 = vmatprep.subr.bf16.mxu0 0
    %471 = vmatpush1.bf16.msra.mxu0 0
    %472 = vmatprep.subr.bf16.mxu0 0
    %473 = vmatpush1.bf16.msra.mxu0 0
    %474 = vmatprep.subr.bf16.mxu0 %v408
    %475 = vmatpush1.bf16.msra.mxu0 %v407
    %476 = vmatprep.subr.bf16.mxu0 %v404
    %477 = vmatpush1.bf16.msra.mxu0 %v403
    %478 = vmatprep.subr.bf16.mxu0 0
    %479 = vmatpush2.bf16.msra.mxu0 0
    %480 = vmatprep.subr.bf16.mxu0 0
    %481 = vmatpush2.bf16.msra.mxu0 0
    %482 = vmatprep.subr.bf16.mxu0 0
    %483 = vmatpush2.bf16.msra.mxu0 0
    %484 = vmatprep.subr.bf16.mxu0 0
    %485 = vmatpush2.bf16.msra.mxu0 0
    %486 = vmatprep.subr.bf16.mxu0 0
    %487 = vmatpush2.bf16.msra.mxu0 0
    %488 = vmatprep.subr.bf16.mxu0 0
    %489 = vmatpush2.bf16.msra.mxu0 0
    %490 = vmatprep.subr.bf16.mxu0 0
    %491 = vmatpush2.bf16.msra.mxu0 0
    %492 = vmatprep.subr.bf16.mxu0 0
    %493 = vmatpush2.bf16.msra.mxu0 0
    %494 = vmatprep.mubr.bf16.mxu0 0
    %495 = vmatmul.mubr.bf16.gmra.mxu0 %v419
    %v496 = vpop.f32.mrf.mxu0
    %v497 = vadd.f32 %v371, %v496
    %v498 = vpop.f32.mrf.mxu0
    %v499 = vadd.f32 %v373, %v498
    %v500 = vpop.f32.mrf.mxu0
    %v501 = vpop.f32.mrf.mxu0
    %502 = vdwg.mxu0
    %v503 = vld [vmem:[%s5] sm:$0xf]
    %v505 = vlaneseq
    %v506 = vshrl.u32 %v505, 7
    %v507 = vsub.s32 0, %v506
    %v508 = vrot.slane %v503, %v507
    %v509 = vlaneseq
    %v510 = vshrl.u32 %v509, 7
    %v511 = vsub.s32 1, %v510
    %v512 = vrot.slane %v503, %v511
    %v513 = vlaneseq
    %v514 = vshrl.u32 %v513, 7
    %v515 = vsub.s32 2, %v514
    %v516 = vrot.slane %v503, %v515
    %v517 = vlaneseq
    %v518 = vshrl.u32 %v517, 7
    %v519 = vsub.s32 3, %v518
    %v520 = vrot.slane %v503, %v519
    %v525 = vadd.f32 %v456, %v508
    %v526 = vadd.f32 %v458, %v512
    %v527 = vadd.f32 %v497, %v516
    %v528 = vadd.f32 %v499, %v520
    %v529 = vxor.u32 %v525, 2147483648
    %v530 = vxor.u32 %v526, 2147483648
    %v531 = vmul.f32 %v529, 1.442695
    %v532 = vpow.pop %v531
    %v533 = vmul.f32 %v530, 1.442695
    %v534 = vpow.pop %v533
    %v535 = vadd.f32 %v532, 1.0
    %v536 = vadd.f32 %v534, 1.0
    %v537 = vrcp.pop %v535
    %v538 = vmul.f32 1.0, %v537
    %v539 = vrcp.pop %v536
    %v540 = vmul.f32 1.0, %v539
    %v541 = vtanh.pop %v527
    %v542 = vxor.u32 %v528, 2147483648
    %v543 = vmul.f32 %v542, 1.442695
    %v544 = vpow.pop %v543
    %v545 = vadd.f32 %v544, 1.0
    %v546 = vrcp.pop %v545
    %v547 = vmul.f32 1.0, %v546
    %v548 = vmul.f32 %v540, %v91
    %v549 = vmul.f32 %v538, %v541
    %v550 = vadd.f32 %v548, %v549
    %v551 = vtanh.pop %v550
    %v552 = vmul.f32 %v547, %v551
    %v553 = vmul.f32 %v90, 0.1
    %v554 = vmul.f32 %v552, 0.9
    %v555 = vadd.f32 %v553, %v554
    %v556 = vmul.f32 %v91, 0.1
    %v557 = vmul.f32 %v550, 0.9
    %v558 = vadd.f32 %v556, %v557
    %559 = vst [vmem:[#allocation11] sm:$0xff] %v555
    %560 = vst [vmem:[#allocation12] sm:$0xff] %v558
    // Predicated region
    $region46: #{tpu_custom_call.1} parent=1 // pred_check
      _
    $region47: #{tpu_custom_call.1} parent=1 // pred_check_branch
      %562 = sbr.rel (0) target = $region49
    $region48: #{tpu_custom_call.1} parent=1 // pred_region
      %s564 = ssub.s32 128, 128
      %565 = vsyncadd [#allocation4], %s564
      %s567 = sshll.u32 [#allocation11], 4
      %s568 = int_to_ptr.vmem [resolvable:$true] %s567
      %570 = dma.vmem_to_hbm [thread:$0]  %s568, 128, %s6, [#allocation4]
    $region49: #{tpu_custom_call.1} parent=1 // pred_fallthru
      _
    // Predicated region
    $region50: #{tpu_custom_call.1} parent=1 // pred_check
      _
    $region51: #{tpu_custom_call.1} parent=1 // pred_check_branch
      %572 = sbr.rel (0) target = $region53
    $region52: #{tpu_custom_call.1} parent=1 // pred_region
      %s574 = ssub.s32 128, 128
      %575 = vsyncadd [#allocation13], %s574
      %s577 = sshll.u32 [#allocation12], 4
      %s578 = int_to_ptr.vmem [resolvable:$true] %s577
      %580 = dma.vmem_to_hbm [thread:$0]  %s578, 128, %s7, [#allocation13]
    $region53: #{tpu_custom_call.1} parent=1 // pred_fallthru
      _
    // Predicated region
    $region54: #{tpu_custom_call.1} parent=1 // pred_check
      _
    $region55: #{tpu_custom_call.1} parent=1 // pred_check_branch
      %582 = sbr.rel (0) target = $region57
    $region56: #{tpu_custom_call.1} parent=1 // pred_region
      %583 = dma.done [#allocation4], 128
    $region57: #{tpu_custom_call.1} parent=1 // pred_fallthru
      _
    // Predicated region
    $region58: #{tpu_custom_call.1} parent=1 // pred_check
      _
    $region59: #{tpu_custom_call.1} parent=1 // pred_check_branch
      %585 = sbr.rel (0) target = $region61
    $region60: #{tpu_custom_call.1} parent=1 // pred_region
      %586 = dma.done [#allocation13], 128
    $region61: #{tpu_custom_call.1} parent=1 // pred_fallthru
      _
    %587 = vsyncpa [#allocation3], 1
    %588 = vsyncpa [#allocation6], 1
    %589 = vsyncpa [#allocation9], 1
    %590 = vsyncpa [#allocation4], 1
    %591 = vsyncpa [#allocation13], 1

</llo_original>
